<compile_context>
chip_gen: v6e
topology: v6e:2x2x1
jax: 0.10.0
libtpu: 0.0.40
codegen_flags: <defaults>
</compile_context>

<pallas_src>
import jax
import jax.numpy as jnp
from jax.experimental import pallas as pl
from jax.experimental.pallas import tpu as pltpu

DIMS = 50            # self.dims = 50 (chunk size)
RATIO = 6
HID = DIMS // RATIO  # 8


def _fc_index(k: int) -> int:
    """PyTorch loop: i = k+1; index = i % 4; 1->fc1, 2->fc2, else fc3 (fc4 unused)."""
    m = (k + 1) % 4
    if m == 1:
        return 0
    if m == 2:
        return 1
    return 2


def _default_block_budget() -> int:
    """~4 MiB per input block (double-buffered ~8 MiB): ~86% of the HBM roofline and
    safely inside every generation's scoped-VMEM default (v5e 16 MiB, v6e/v7x 32 MiB)."""
    try:
        vmem = pltpu.get_tpu_info().vmem_capacity_bytes
    except Exception:
        vmem = 64 << 20
    return max(1 << 20, min(4 << 20, vmem // 16))


def _make_pooled_sum_kernel(ch: int, ch_tile: int, needs_ch_mask: bool):
    def kernel(x_ref, o_ref):
        # x_ref: (1, ch_tile, w_tile) block of x in its native (possibly half) dtype.
        # o_ref: (1, 1, w_tile) float32 accumulator; same output block across the CH grid
        #        axis (innermost), so it stays resident in VMEM for the whole reduction.
        @pl.when(pl.program_id(2) == 0)
        def _init():
            o_ref[...] = jnp.zeros_like(o_ref)

        xv = x_ref[...]
        if needs_ch_mask:
            # Zero rows past the true C*H extent (tail tile / padded reads).
            base = pl.program_id(2) * ch_tile
            row = jax.lax.broadcasted_iota(jnp.int32, xv.shape, 1)
            xv = jnp.where(base + row < ch, xv, jnp.zeros_like(xv))

        # AdaptiveAvgPool2d numerator: per-column sum over C*H, accumulated in f32.
        o_ref[...] += jnp.sum(xv, axis=1, keepdims=True, dtype=jnp.float32)

    return kernel


def time_attention_half(x, fc_w1, fc_w2, *, block_budget_bytes=None):
    """x: (B, C, H, W) NCHW.  fc_w1: (4, HID, 50), fc_w2: (4, 50, HID) 1x1-conv weights."""
    B, C, H, W = x.shape
    K = W // DIMS
    assert K >= 1, "W must be at least 50"
    Wc = K * DIMS
    CH = C * H

    # Free reshape (merges contiguous dims; no transpose, no remainder slice copy).
    x3 = x.reshape(B, CH, W)
    itemsize = x.dtype.itemsize
    sub_align = max(8, 32 // max(itemsize, 1))   # 8 for f32, 16 for bf16/f16, 32 for int8
    budget = block_budget_bytes if block_budget_bytes is not None else _default_block_budget()

    # ---- W (lane) tile: full W when small, else 128-aligned tiles (bounds VMEM for any W
    #      and gives v7x's second TensorCore work at batch 1). Partial tail tiles are fine:
    #      garbage lanes only feed out-of-bounds output lanes, which are dropped on write.
    if W > 1024:
        w_tile = 1024
    elif B == 1 and W >= 256:
        w_tile = 128 * max(1, (W // 2) // 128)   # split W across cores at batch 1
    else:
        w_tile = W                               # full dim is always a legal block
    n_w = pl.cdiv(W, w_tile)

    # ---- CH (sublane) tile: largest sublane-aligned tile under the byte budget.
    if CH * w_tile * itemsize <= budget:
        ch_tile = CH
    else:
        rows = (budget // (w_tile * itemsize)) // sub_align * sub_align
        ch_tile = max(sub_align, rows)
    n_ch = pl.cdiv(CH, ch_tile)
    needs_ch_mask = (CH % ch_tile) != 0

    kernel = _make_pooled_sum_kernel(CH, ch_tile, needs_ch_mask)

    cost = pl.CostEstimate(
        flops=B * CH * W,
        transcendentals=0,
        bytes_accessed=B * CH * W * itemsize + B * W * 4,
    )

    pooled_sum = pl.pallas_call(
        kernel,
        out_shape=jax.ShapeDtypeStruct((B, 1, W), jnp.float32),
        grid=(B, n_w, n_ch),                       # CH reduction axis MUST stay innermost
        in_specs=[pl.BlockSpec((1, ch_tile, w_tile), lambda b, w, c: (b, c, w))],
        out_specs=pl.BlockSpec((1, 1, w_tile), lambda b, w, c: (b, 0, w)),
        compiler_params=pltpu.CompilerParams(
            dimension_semantics=("parallel", "parallel", "arbitrary")),
        cost_estimate=cost,
    )(x3)

    # ---- tiny epilogue on the pooled (B, W) result, plain JAX ----
    # Drop the W-remainder on the pooled result (cheap) instead of slicing x (full HBM copy).
    pooled_mean = pooled_sum[:, 0, :Wc].reshape(B, K, DIMS) * (1.0 / CH)

    # Per-chunk weight selection (fc1/fc2/fc3 per the forward loop), pre-transposed.
    sel = jnp.array([_fc_index(k) for k in range(K)], dtype=jnp.int32)
    w1t = jnp.transpose(fc_w1, (0, 2, 1))[sel].astype(jnp.float32)   # (K, 50, HID)
    w2t = jnp.transpose(fc_w2, (0, 2, 1))[sel].astype(jnp.float32)   # (K, HID, 50)

    h = jnp.maximum(
        jnp.einsum('bkd,kdh->bkh', pooled_mean, w1t,
                   precision=jax.lax.Precision.HIGHEST), 0.0)        # ReLU
    y = jnp.einsum('bkh,khd->bkd', h, w2t,
                   precision=jax.lax.Precision.HIGHEST)              # (B, K, 50)

    # (B, K, 50) -> (B, 1, 1, K*50)  == torch.cat(outs, dim=3), then sigmoid.
    att = jax.nn.sigmoid(y).reshape(B, 1, 1, Wc).astype(x.dtype)
    return att


def _reference(x, fc_w1, fc_w2):
    """Pure-JAX reimplementation of the PyTorch forward for validation."""
    B, C, H, W = x.shape
    K = W // DIMS
    outs = []
    for k in range(K):
        chunk = x[..., k * DIMS:(k + 1) * DIMS]          # (B, C, H, 50)
        xt = jnp.transpose(chunk, (0, 3, 2, 1))          # (B, 50, H, C)
        ap = jnp.mean(xt, axis=(2, 3))                   # (B, 50)
        idx = _fc_index(k)
        h = jnp.maximum(jnp.matmul(ap, fc_w1[idx].T,
                                   precision=jax.lax.Precision.HIGHEST), 0.0)
        y = jnp.matmul(h, fc_w2[idx].T,
                       precision=jax.lax.Precision.HIGHEST)
        outs.append(y)
    att = jnp.concatenate(outs, axis=-1)                 # (B, K*50)
    return jax.nn.sigmoid(att).reshape(B, 1, 1, K * DIMS)


if __name__ == "__main__":
    key = jax.random.PRNGKey(0)
    k_x, k_w1, k_w2 = jax.random.split(key, 3)

    # fc1..fc4 1x1-conv weights (bias=False): (out, in, 1, 1) squeezed to (out, in).
    fc_w1 = jax.random.normal(k_w1, (4, HID, DIMS), dtype=jnp.float32) * 0.1
    fc_w2 = jax.random.normal(k_w2, (4, DIMS, HID), dtype=jnp.float32) * 0.1

    fwd = jax.jit(time_attention_half, static_argnames=("block_budget_bytes",))

    # Small configs exercising: (1) single-block path + W-remainder drop,
    # (2) CH tiling with a masked tail + W tiling at batch 1 (tiny forced budget),
    # (3) W tiling with a partial last W tile.
    configs = [
        (2, 4, 8, 230, None),
        (1, 3, 7, 530, 8192),
        (1, 2, 3, 1430, None),
    ]
    for (B, C, H, W, budget) in configs:
        kx = jax.random.fold_in(k_x, W)
        x = jax.random.normal(kx, (B, C, H, W), dtype=jnp.float32)
        att = fwd(x, fc_w1, fc_w2, block_budget_bytes=budget)
        att = jax.block_until_ready(att)
        ref = _reference(x, fc_w1, fc_w2)
        Kc = W // DIMS
        assert att.shape == (B, 1, 1, Kc * DIMS), att.shape
        assert jnp.allclose(att, ref, atol=1e-5, rtol=1e-5), \
            f"mismatch vs reference for shape {(B, C, H, W)}"

    print("KERNEL_OK")
</pallas_src>

<mosaic_0001>
module attributes {stable_mosaic.version = 11 : i64} {
  func.func @kernel(%arg0: i32, %arg1: i32, %arg2: i32, %arg3: memref<1x32x230xf32, #tpu.memory_space<vmem>>, %arg4: memref<1x1x230xf32, #tpu.memory_space<vmem>>) attributes {dimension_semantics = [#tpu.dimension_semantics<parallel>, #tpu.dimension_semantics<parallel>, #tpu.dimension_semantics<arbitrary>], iteration_bounds = array<i64: 2, 1, 1>, scalar_prefetch = 0 : i64, scratch_operands = 0 : i64, tpu.core_type = #tpu.core_type<tc>, window_params = [{transform_indices = @transform_0, window_bounds = array<i64: 1, 32, 230>}, {transform_indices = @transform_1, window_bounds = array<i64: 1, 1, 230>}]} {
    %c0_i32 = arith.constant 0 : i32
    %0 = arith.cmpi eq, %arg2, %c0_i32 : i32
    %1 = arith.extui %0 : i1 to i32
    %c0_i32_0 = arith.constant 0 : i32
    %2 = arith.cmpi ne, %1, %c0_i32_0 : i32
    scf.if %2 {
      %cst_9 = arith.constant 0.000000e+00 : f32
      %9 = vector.broadcast %cst_9 : f32 to vector<1x1x230xf32>
      %c0_10 = arith.constant 0 : index
      %c0_11 = arith.constant 0 : index
      %c0_12 = arith.constant 0 : index
      %10 = vector.load %arg4[%c0_10, %c0_11, %c0_12] : memref<1x1x230xf32, #tpu.memory_space<vmem>>, vector<1x1x230xf32>
      tpu.vector_store %arg4[%c0_10, %c0_11, %c0_12], %9 {strides = array<i32>} : memref<1x1x230xf32, #tpu.memory_space<vmem>>, vector<1x1x230xf32>,
    } else {
    }
    %c0 = arith.constant 0 : index
    %c0_1 = arith.constant 0 : index
    %c0_2 = arith.constant 0 : index
    %3 = vector.load %arg3[%c0, %c0_1, %c0_2] : memref<1x32x230xf32, #tpu.memory_space<vmem>>, vector<1x32x230xf32>
    %c0_3 = arith.constant 0 : index
    %c0_4 = arith.constant 0 : index
    %c0_5 = arith.constant 0 : index
    %4 = vector.load %arg4[%c0_3, %c0_4, %c0_5] : memref<1x1x230xf32, #tpu.memory_space<vmem>>, vector<1x1x230xf32>
    %cst = arith.constant dense<0.000000e+00> : vector<1x230xf32>
    %5 = vector.multi_reduction <add>, %3, %cst [1] : vector<1x32x230xf32> to vector<1x230xf32>
    %6 = vector.shape_cast %5 : vector<1x230xf32> to vector<1x1x230xf32>
    %7 = arith.addf %4, %6 : vector<1x1x230xf32>
    %c0_6 = arith.constant 0 : index
    %c0_7 = arith.constant 0 : index
    %c0_8 = arith.constant 0 : index
    %8 = vector.load %arg4[%c0_6, %c0_7, %c0_8] : memref<1x1x230xf32, #tpu.memory_space<vmem>>, vector<1x1x230xf32>
    tpu.vector_store %arg4[%c0_6, %c0_7, %c0_8], %7 {strides = array<i32>} : memref<1x1x230xf32, #tpu.memory_space<vmem>>, vector<1x1x230xf32>,
    return
  }
  func.func @transform_0(%arg0: i32, %arg1: i32, %arg2: i32) -> (i32, i32, i32) {
    %c0_i32 = arith.constant 0 : i32
    return %arg0, %arg2, %arg1 : i32, i32, i32
  }
  func.func @transform_1(%arg0: i32, %arg1: i32, %arg2: i32) -> (i32, i32, i32) {
    %c0_i32 = arith.constant 0 : i32
    %c0_i32_0 = arith.constant 0 : i32
    return %arg0, %c0_i32, %arg1 : i32, i32, i32
  }
}

</mosaic_0001>

<llo_original>
// kernel: time_attention_half.1
$region0: #{time_attention_half.1}
  #allocation0 [shape = 'u32[]', space=smem, size = 0x4, offset = 0x4, fixed_abs, tag = 'smem constant byte address 0x4 - core index']
  #allocation1 [shape = 'u32[144,128]{1,0:T(1,128)}', space=vmem, size = 0x12000, scoped, tag = 'internal scratch']
  %s0 = inlined_call_operand.hbm [shape: f32[2,32,230], index: 0, kind: input, shape index: {}]
  %s1 = inlined_call_operand.vmem [shape: f32[2,1,230], index: 1, kind: output, shape index: {}]
  %s2 = sld [smem:[#allocation0]]
  $region45: #{time_attention_half.1} parent=0
    _
  %s4 = ssub.s32 1, %s2
  %s5 = scalar_select 0, %s4, %s2
  $region1: #{time_attention_half.1} parent=0
    #allocation2 [shape = 'u8[65536]{0}', space=vmem, size = 0x10000, scoped, tag = 'input window, operand 0']
    #allocation3 [shape = 's32[2]{0}', space=sflag, size = 0x8, scoped, tag = 'scoped memory for time_attention_half.1']
    %6 = vsyncpa [#allocation3], 0
    %s7 = scalar_lea.sflag [#allocation3], 1
    %8 = vsyncpa %s7, 0
    loop: start=0, step=1, limit=4
    $region2: #{time_attention_half.1} parent=1 // loop_pre_header
      _
    $region3: #{time_attention_half.1} parent=1 // loop_header
      %s10 = sphi 0, %s14
      %p11 = scmp.ge.s32.totalorder %s10, 4
      %s17 = sphi 0, %s36
      %s18 = sphi 0, %s32
      %s19 = sphi 0, %s28
      %s20 = sphi 0, %s17
      %s21 = sphi 0, %s18
      %s22 = sphi 0, %s19
      %s23 = sphi 0, %s20
      %s24 = sphi 0, %s21
      %s25 = sphi 0, %s22
      %s43 = sphi 0, %s45
      %s46 = sphi 0, %s43
      %s47 = sphi 0, %s46
      %s63 = sphi 0, %s47
      %s71 = sphi 0, %s73
      %s74 = sphi 0, %s71
      %s75 = sphi 0, %s74
      %s91 = sphi 0, %s75
    $region4: #{time_attention_half.1} parent=1 // loop_header_branch
      %13 = sbr.rel (%p11) target = $region8
    $region5: #{time_attention_half.1} parent=1 // loop_body
      %s15 = ssub.s32 %s10, 1
      %s16 = ssub.s32 %s10, 2
      %s26 = sadd.s32 1, %s19
      %p27 = scmp.ge.s32.totalorder %s26, 1
      %s28 = scalar_select %p27, 0, %s26
      %s29 = sadd.s32 1, %s18
      %s30 = scalar_select %p27, %s29, %s18
      %p31 = scmp.ge.s32.totalorder %s30, 1
      %s32 = scalar_select %p31, 0, %s30
      %s33 = sadd.s32 1, %s17
      %s34 = scalar_select %p31, %s33, %s17
      %p35 = scmp.ge.s32.totalorder %s34, 2
      %s36 = scalar_select %p35, 0, %s34
      %s37 = ssub.s32 %s17, %s36
      %s38 = ssub.s32 %s19, %s28
      %s39 = sor.u32 %s37, %s38
      %s40 = ssub.s32 %s18, %s32
      %s41 = sor.u32 %s39, %s40
      %p42 = scmp.eq.s32.totalorder %s41, 0
      %s44 = sadd.s32 %s43, 1
      %s45 = scalar_select %p42, %s43, %s44
      %p48 = pneg %p42
      %p49 = scmp.eq.s32.totalorder %s10, 1
      %p50 = por %p48, %p49
      %p51 = scmp.ne.s32.totalorder %s43, %s46
      %p52 = scmp.eq.s32.totalorder %s10, 0
      %p53 = por %p51, %p52
      %p54 = scmp.ne.s32.totalorder %s43, %s46
      %p55 = scmp.eq.s32.totalorder %s15, 1
      %p56 = por %p54, %p55
      %p57 = scmp.ne.s32.totalorder %s46, %s47
      %p58 = scmp.eq.s32.totalorder %s15, 0
      %p59 = por %p57, %p58
      %p60 = scmp.ne.s32.totalorder %s46, %s47
      %p61 = scmp.eq.s32.totalorder %s16, 1
      %p62 = por %p60, %p61
      %p64 = scmp.ne.s32.totalorder %s47, %s63
      %p65 = scmp.eq.s32.totalorder %s16, 0
      %p66 = por %p64, %p65
      %s67 = ssub.s32 %s17, %s36
      %s68 = ssub.s32 %s18, %s32
      %s69 = sor.u32 %s67, %s68
      %p70 = scmp.eq.s32.totalorder %s69, 0
      %s72 = sadd.s32 %s71, 1
      %s73 = scalar_select %p70, %s71, %s72
      %p76 = pneg %p70
      %p77 = scmp.eq.s32.totalorder %s10, 1
      %p78 = por %p76, %p77
      %p79 = scmp.ne.s32.totalorder %s71, %s74
      %p80 = scmp.eq.s32.totalorder %s10, 0
      %p81 = por %p79, %p80
      %p82 = scmp.ne.s32.totalorder %s71, %s74
      %p83 = scmp.eq.s32.totalorder %s15, 1
      %p84 = por %p82, %p83
      %p85 = scmp.ne.s32.totalorder %s74, %s75
      %p86 = scmp.eq.s32.totalorder %s15, 0
      %p87 = por %p85, %p86
      %p88 = scmp.ne.s32.totalorder %s74, %s75
      %p89 = scmp.eq.s32.totalorder %s16, 1
      %p90 = por %p88, %p89
      %p92 = scmp.ne.s32.totalorder %s75, %s91
      %p93 = scmp.eq.s32.totalorder %s16, 0
      %p94 = por %p92, %p93
      %p95 = scmp.le.s32.totalorder 1, %s10
      %p96 = scmp.lt.s32.totalorder %s10, 3
      %p97 = pnand %p95, %p96
      %p98 = pneg %p97
      // Predicated region
      $region9: #{time_attention_half.1} parent=5 // pred_check
        _
      $region10: #{time_attention_half.1} parent=5 // pred_check_branch
        %100 = sbr.rel (%p97) target = $region12
      $region11: #{time_attention_half.1} parent=5 // pred_region
        %s101 = ssub.s32 %s10, 1
      $region12: #{time_attention_half.1} parent=5 // pred_fallthru
        _
      %p102 = scmp.lt.s32.totalorder %s10, 2
      // Predicated region
      $region13: #{time_attention_half.1} parent=5 // pred_check
        %p103 = pneg %p102
      $region14: #{time_attention_half.1} parent=5 // pred_check_branch
        %105 = sbr.rel (%p103) target = $region16
      $region15: #{time_attention_half.1} parent=5 // pred_region
        // Predicated region
        $region17: #{time_attention_half.1} parent=15 // pred_check
          %p106 = pneg %p53
        $region18: #{time_attention_half.1} parent=15 // pred_check_branch
          %108 = sbr.rel (%p106) target = $region20
        $region19: #{time_attention_half.1} parent=15 // pred_region
          %s109 = sand.u32 %s43, 1
          %s110 = scalar_lea.sflag [#allocation3], %s109
          %s111 = sand.u32 %s43, 1
          %s112 = smul.addr %s111, 64
          %s113 = scalar_lea.vmem [#allocation2], %s112
          %s114 = smul.u32 4, %s19
          %s115 = smul.u32 2, %s18
          %s117 = ssub.s32 1024, 1024
          %118 = vsyncadd %s110, %s117
          %s119 = smul.addr %s114, 2
          %s120 = sadd.s32 %s115, %s119
          %s121 = smul.addr %s17, 8
          %s122 = sadd.s32 %s120, %s121
          %s123 = smul.addr %s122, 128
          %s124 = scalar_lea.hbm %s0, %s123
          %s125 = sshll.u32 %s113, 4
          %s126 = int_to_ptr.vmem [resolvable:$true] %s125
          %131 = dma.hbm_to_vmem [thread:$0]  %s124, 1024, %s126, %s110, 256, 256, 16
        $region20: #{time_attention_half.1} parent=15 // pred_fallthru
          _
      $region16: #{time_attention_half.1} parent=5 // pred_fallthru
        _
      %p132 = scmp.le.s32.totalorder 1, %s10
      %p133 = scmp.lt.s32.totalorder %s10, 3
      %p134 = pnand %p132, %p133
      %p135 = pneg %p134
      // Predicated region
      $region21: #{time_attention_half.1} parent=5 // pred_check
        _
      $region22: #{time_attention_half.1} parent=5 // pred_check_branch
        %137 = sbr.rel (%p134) target = $region24
      $region23: #{time_attention_half.1} parent=5 // pred_region
        %s138 = ssub.s32 %s10, 1
        %s139 = sand.u32 %s46, 1
        %s140 = scalar_lea.sflag [#allocation3], %s139
        %s141 = sand.u32 %s46, 1
        %s142 = smul.addr %s141, 64
        %s143 = scalar_lea.vmem [#allocation2], %s142
        // Predicated region
        $region25: #{time_attention_half.1} parent=23 // pred_check
          %p144 = pneg %p59
        $region26: #{time_attention_half.1} parent=23 // pred_check_branch
          %146 = sbr.rel (%p144) target = $region28
        $region27: #{time_attention_half.1} parent=23 // pred_region
          %147 = dma.done %s140, 1024
        $region28: #{time_attention_half.1} parent=23 // pred_fallthru
          _
        %s148 = sand.u32 %s46, 1
        %s149 = scalar_lea.sflag [#allocation3], %s148
        %s150 = sand.u32 %s46, 1
        %s151 = smul.addr %s150, 64
        %s152 = scalar_lea.vmem [#allocation2], %s151
        %p153 = pneg %p59
        %p154 = pneg %p56
        %p155 = pneg %p87
        %p156 = pneg %p84
        %s157 = smul.u32 2, %s21
        %p158 = scmp.lt.s32.totalorder %s20, 1
        %s159 = scalar_select %p158, %s20, 1
        %p160 = scmp.lt.s32.totalorder %s157, 1
        %s161 = scalar_select %p160, %s157, 1
        %s162 = smul.addr %s159, 2
        %s163 = sadd.s32 %s161, %s162
        %s164 = scalar_lea.vmem %s1, %s163
        %s165 = smul.u32 4, %s22
        %s166 = smul.u32 2, %s21
        %s167 = smul.u32 2, %s21
        %p168 = scmp.lt.s32.totalorder %s20, 1
        %s169 = scalar_select %p168, %s20, 1
        %p170 = scmp.lt.s32.totalorder %s167, 1
        %s171 = scalar_select %p170, %s167, 1
        %s172 = smul.addr %s169, 2
        %s173 = sadd.s32 %s171, %s172
        %s174 = scalar_lea.vmem %s1, %s173
        %s175 = smul.u32 2, %s21
        %p176 = scmp.eq.s32.totalorder %s22, 0
        // Predicated region
        $region29: #{time_attention_half.1} parent=23 // pred_check
          %p177 = pneg %p176
        $region30: #{time_attention_half.1} parent=23 // pred_check_branch
          %179 = sbr.rel (%p177) target = $region32
        $region31: #{time_attention_half.1} parent=23 // pred_region
          %v180 = vlaneseq
          %vm181 = vcmp.ge.s32.totalorder %v180, 0
          %vm182 = vcmp.lt.s32.totalorder %v180, 230
          %vm183 = vmand %vm181, %vm182
          %184 = vst.msk [vmem:[%s174] sm:$0x3] %vm183, 0.0
        $region32: #{time_attention_half.1} parent=23 // pred_fallthru
          _
        %v185 = vld [vmem:[%s143] sm:$0xff]
        %v186 = vld [vmem:[%s143 + $0x8] sm:$0xff]
        %v187 = vld [vmem:[%s143 + $0x10] sm:$0xff]
        %v188 = vld [vmem:[%s143 + $0x18] sm:$0xff]
        %v189 = vld [vmem:[%s143 + $0x20] sm:$0xff]
        %v190 = vld [vmem:[%s143 + $0x28] sm:$0xff]
        %v191 = vld [vmem:[%s143 + $0x30] sm:$0xff]
        %v192 = vld [vmem:[%s143 + $0x38] sm:$0xff]
        %v193 = vld [vmem:[%s174] sm:$0x3]
        %v194 = vadd.f32 %v185, %v187
        %v195 = vadd.f32 %v194, %v189
        %v196 = vadd.f32 %v195, %v191
        %v197 = vrot.slane %v196, 4
        %v198 = vadd.f32 %v196, %v197
        %v199 = vrot.slane %v198, 2
        %v200 = vadd.f32 %v198, %v199
        %v201 = vrot.slane %v200, 1
        %v202 = vadd.f32 %v200, %v201
        %vm203 = vcmask 834560
        %v204 = vsel %vm203, %v186, 0.0
        %v205 = vsel %vm203, %v188, 0.0
        %v206 = vadd.f32 %v204, %v205
        %v207 = vsel %vm203, %v190, 0.0
        %v208 = vadd.f32 %v206, %v207
        %v209 = vsel %vm203, %v192, 0.0
        %v210 = vadd.f32 %v208, %v209
        %v211 = vrot.slane %v210, 4
        %v212 = vadd.f32 %v210, %v211
        %v213 = vrot.slane %v212, 2
        %v214 = vadd.f32 %v212, %v213
        %v215 = vrot.slane %v214, 1
        %v216 = vadd.f32 %v214, %v215
        %v219 = vcombine.low %v202, %v216
        %v221 = vunpack.c.l.s4 1966171168
        %v222 = vunpack.c.0.s8 %v221
        %v223 = vlaneseq
        %v224 = vshrl.u32 %v223, 7
        %v225 = vsub.s32 %v222, %v224
        %v226 = vrot.slane %v219, %v225
        %v228 = vunpack.c.l.s4 1966171168
        %v229 = vunpack.c.0.s8 %v228
        %v230 = vlaneseq
        %v231 = vshrl.u32 %v230, 7
        %v232 = vsub.s32 %v229, %v231
        %v233 = vrot.slane %v226, %v232
        %v235 = vadd.f32 %v193, %v233
        %v236 = vlaneseq
        %vm237 = vcmp.ge.s32.totalorder %v236, 0
        %vm238 = vcmp.lt.s32.totalorder %v236, 230
        %vm239 = vmand %vm237, %vm238
        %240 = vst.msk [vmem:[%s174] sm:$0x3] %vm239, %v235
        %s241 = smul.u32 2, %s21
        %p242 = scmp.lt.s32.totalorder %s20, 1
        %s243 = scalar_select %p242, %s20, 1
        %p244 = scmp.lt.s32.totalorder %s241, 1
        %s245 = scalar_select %p244, %s241, 1
        %s246 = smul.addr %s243, 2
        %s247 = sadd.s32 %s245, %s246
        %s248 = scalar_lea.vmem %s1, %s247
        // Predicated region
        $region33: #{time_attention_half.1} parent=23 // pred_check
          %p249 = pneg %p84
        $region34: #{time_attention_half.1} parent=23 // pred_check_branch
          %251 = sbr.rel (%p249) target = $region36
        $region35: #{time_attention_half.1} parent=23 // pred_region
          %s252 = smul.u32 2, %s21
        $region36: #{time_attention_half.1} parent=23 // pred_fallthru
          _
      $region24: #{time_attention_half.1} parent=5 // pred_fallthru
        _
      %p253 = scmp.le.s32.totalorder 2, %s10
      // Predicated region
      $region37: #{time_attention_half.1} parent=5 // pred_check
        %p254 = pneg %p253
      $region38: #{time_attention_half.1} parent=5 // pred_check_branch
        %256 = sbr.rel (%p254) target = $region40
      $region39: #{time_attention_half.1} parent=5 // pred_region
        %s257 = ssub.s32 %s10, 2
        // Predicated region
        $region41: #{time_attention_half.1} parent=39 // pred_check
          %p258 = pneg %p90
        $region42: #{time_attention_half.1} parent=39 // pred_check_branch
          %260 = sbr.rel (%p258) target = $region44
        $region43: #{time_attention_half.1} parent=39 // pred_region
          %s261 = smul.u32 2, %s24
          %p262 = scmp.lt.s32.totalorder %s23, 1
          %s263 = scalar_select %p262, %s23, 1
          %p264 = scmp.lt.s32.totalorder %s261, 1
          %s265 = scalar_select %p264, %s261, 1
          %s266 = smul.addr %s263, 2
          %s267 = sadd.s32 %s265, %s266
          %s268 = scalar_lea.vmem %s1, %s267
        $region44: #{time_attention_half.1} parent=39 // pred_fallthru
          _
      $region40: #{time_attention_half.1} parent=5 // pred_fallthru
        _
    $region6: #{time_attention_half.1} parent=1 // loop_footer
      %s14 = sadd.s32 1, %s10
    $region7: #{time_attention_half.1} parent=1 // loop_footer_branch
      %9 = sbr.rel target = $region3
    $region8: #{time_attention_half.1} parent=1 // loop_exit
      _
    %269 = vsyncpa [#allocation3], 1
    %s270 = scalar_lea.sflag [#allocation3], 1
    %271 = vsyncpa %s270, 1

</llo_original>
